<compile_context>
chip_gen: v6e
topology: v6e:2x2x1
jax: 0.10.0
libtpu: 0.0.40
codegen_flags: <defaults>
</compile_context>

<pallas_src>
import jax
import jax.numpy as jnp
from jax.experimental import pallas as pl
from jax.experimental.pallas import tpu as pltpu


def _cdiv(a, b):
    return -(-a // b)


def _round_up(x, m):
    return _cdiv(x, m) * m


def _block_diag2(a, b):
    """[[a, 0], [0, b]] for 2-D a, b."""
    ra, ca = a.shape
    rb, cb = b.shape
    top = jnp.concatenate([a, jnp.zeros((ra, cb), a.dtype)], axis=1)
    bot = jnp.concatenate([jnp.zeros((rb, ca), b.dtype), b], axis=1)
    return jnp.concatenate([top, bot], axis=0)


def _velocity_kernel(x_ref, w1_ref, b1_ref, g_ref, beta_ref,
                     w2_ref, b2_ref, w3_ref, b3_ref, out_ref):
    """One tile of TM rows, transposed layout (rows on the lane axis).

    x_ref    : (2T, TM)  -- [upstream^T ; downstream^T] columns
    w1_ref   : (2H, 2T)  -- blockdiag(w11^T, w21^T)
    b1/g/beta: (2H, 1)   -- per-feature columns (broadcast over lanes)
    w2_ref   : (2O, 2H)  -- blockdiag(w12^T, w22^T)
    b2_ref   : (2O, 1)
    w3_ref   : (2O, 1)   -- final Linear(2O -> 1) weight as a column
    b3_ref   : (1, 1)
    out_ref  : (1, TM)   -- lane-dense output block
    """
    # Fused Linear(T->H) for both branches: (2H, 2T) @ (2T, TM) -> (2H, TM)
    h = jnp.dot(w1_ref[...], x_ref[...],
                preferred_element_type=jnp.float32) + b1_ref[...]

    # Dropout(0.5) -> identity (eval mode).
    # Per-branch LayerNorm over the feature (sublane) axis, eps = 1e-5.
    H = h.shape[0] // 2

    def layer_norm(seg):
        mu = jnp.mean(seg, axis=0, keepdims=True)        # sublane reduce -> XLU
        c = seg - mu
        var = jnp.mean(c * c, axis=0, keepdims=True)
        return c * jax.lax.rsqrt(var + 1e-5)

    hn = jnp.concatenate([layer_norm(h[:H]), layer_norm(h[H:])], axis=0)
    hn = hn * g_ref[...] + beta_ref[...]
    hn = jnp.maximum(hn, 0.0)                            # ReLU
    hn = hn.astype(w2_ref.dtype)                         # match MXU operand dtype

    # Fused Linear(H->O): (2O, 2H) @ (2H, TM) -> (2O, TM), then sigmoid.
    o = jnp.dot(w2_ref[...], hn, preferred_element_type=jnp.float32) + b2_ref[...]
    o = jax.nn.sigmoid(o)

    # Linear(2O -> 1): weighted sublane reduction -> (1, TM) lane-dense.
    out = jnp.sum(w3_ref[...] * o, axis=0, keepdims=True) + b3_ref[...]
    out_ref[...] = out.astype(out_ref.dtype)


def velocity_model_forward(upstream, downstream, params, *,
                           block_rows=1024, compute_dtype=None):
    """upstream, downstream: (B, N, T) float32 or bfloat16.  Returns (N, B) f32."""
    B, N, T = upstream.shape
    M = B * N
    H = params["w11"].shape[1]
    O = params["w12"].shape[1]
    dt = compute_dtype if compute_dtype is not None else upstream.dtype

    # (B, N, T) -> (M, T) -> (T, M): put the big M axis on the 128-lane axis,
    # and stack the two branches along the (small) feature/sublane axis.
    up_t = upstream.reshape(M, T).T.astype(dt)
    down_t = downstream.reshape(M, T).T.astype(dt)
    x = jnp.concatenate([up_t, down_t], axis=0)                          # (2T, M)

    # Balanced lane tiling: minimal padding; force >= 2 grid steps (when M
    # allows) so a 2-TensorCore chip (v7x) can shard the parallel axis.
    LANE = 128
    num_tiles = max(1, _cdiv(M, block_rows))
    if num_tiles == 1 and M > LANE:
        num_tiles = 2
    TM = _round_up(_cdiv(M, num_tiles), LANE)
    M_pad = TM * num_tiles
    if M_pad != M:
        x = jnp.pad(x, ((0, 0), (0, M_pad - M)))

    f32 = jnp.float32
    w1_bd = _block_diag2(params["w11"].T, params["w21"].T).astype(dt)    # (2H, 2T)
    w2_bd = _block_diag2(params["w12"].T, params["w22"].T).astype(dt)    # (2O, 2H)
    b1 = jnp.concatenate([params["b11"], params["b21"]], axis=1).T.astype(f32)
    g = jnp.concatenate([params["g11"], params["g21"]], axis=1).T.astype(f32)
    beta = jnp.concatenate([params["beta11"], params["beta21"]], axis=1).T.astype(f32)
    b2 = jnp.concatenate([params["b12"], params["b22"]], axis=1).T.astype(f32)
    w3 = params["w3"].astype(f32)                                        # (2O, 1)
    b3 = params["b3"].astype(f32)                                        # (1, 1)

    def const_spec(shape):
        # Same block every grid step -> stays VMEM-resident across the grid.
        return pl.BlockSpec(shape, lambda i, _n=len(shape): (0,) * _n)

    out = pl.pallas_call(
        _velocity_kernel,
        out_shape=jax.ShapeDtypeStruct((1, M_pad), jnp.float32),
        grid=(num_tiles,),
        in_specs=[
            pl.BlockSpec((2 * T, TM), lambda i: (0, i)),   # input columns
            const_spec((2 * H, 2 * T)),                    # W1 block-diag
            const_spec((2 * H, 1)),                        # b1
            const_spec((2 * H, 1)),                        # gamma
            const_spec((2 * H, 1)),                        # beta
            const_spec((2 * O, 2 * H)),                    # W2 block-diag
            const_spec((2 * O, 1)),                        # b2
            const_spec((2 * O, 1)),                        # w3 column
            const_spec((1, 1)),                            # b3
        ],
        out_specs=pl.BlockSpec((1, TM), lambda i: (0, i)), # lane-dense output
        compiler_params=pltpu.CompilerParams(
            dimension_semantics=("parallel",),
            vmem_limit_bytes=48 * 1024 * 1024),
    )(x, w1_bd, b1, g, beta, w2_bd, b2, w3, b3)

    # (1, M_pad) -> (B, N) -> transpose(1, 0) -> (N, B)
    return out[0, :M].reshape(B, N).T


def init_params(key, num_timesteps_input, hidden_units, out_units):
    """Param init mimicking PyTorch Linear default (U[-1/sqrt(fan_in), +...])."""
    T, H, O = num_timesteps_input, hidden_units, out_units
    ks = jax.random.split(key, 10)

    def linear(kw, kb, fan_in, fan_out):
        bound = 1.0 / jnp.sqrt(jnp.float32(fan_in))
        # stored as (fan_in, fan_out) so the reference does x @ W
        w = jax.random.uniform(kw, (fan_in, fan_out), jnp.float32, -bound, bound)
        b = jax.random.uniform(kb, (1, fan_out), jnp.float32, -bound, bound)
        return w, b

    w11, b11 = linear(ks[0], ks[1], T, H)
    w12, b12 = linear(ks[2], ks[3], H, O)
    w21, b21 = linear(ks[4], ks[5], T, H)
    w22, b22 = linear(ks[6], ks[7], H, O)
    w3, b3 = linear(ks[8], ks[9], 2 * O, 1)

    return dict(
        w11=w11, b11=b11,
        g11=jnp.ones((1, H), jnp.float32), beta11=jnp.zeros((1, H), jnp.float32),
        w12=w12, b12=b12,
        w21=w21, b21=b21,
        g21=jnp.ones((1, H), jnp.float32), beta21=jnp.zeros((1, H), jnp.float32),
        w22=w22, b22=b22,
        w3=w3, b3=b3,
    )


def _reference_forward(upstream, downstream, params):
    """Pure-JAX reference for correctness checking (f32)."""
    def branch(x, w1, b1, g, beta, w2, b2):
        h = x @ w1 + b1
        mu = h.mean(-1, keepdims=True)
        var = ((h - mu) ** 2).mean(-1, keepdims=True)
        hn = (h - mu) / jnp.sqrt(var + 1e-5) * g + beta
        hn = jnp.maximum(hn, 0.0)
        return jax.nn.sigmoid(hn @ w2 + b2)

    xu = branch(upstream, params["w11"], params["b11"], params["g11"],
                params["beta11"], params["w12"], params["b12"])
    xd = branch(downstream, params["w21"], params["b21"], params["g21"],
                params["beta21"], params["w22"], params["b22"])
    x = jnp.concatenate([xu, xd], axis=2)
    out = x @ params["w3"] + params["b3"]
    return out[..., 0].T


if __name__ == "__main__":
    # Small shapes consistent with the module:
    #   B=2 (batch), N=8 (road segments), T=16 (num_timesteps_input),
    #   hidden_units=32, out_units=8
    B, N, T, H, O = 2, 8, 16, 32, 8

    key = jax.random.PRNGKey(0)
    k_up, k_down, k_params = jax.random.split(key, 3)

    upstream = jax.random.normal(k_up, (B, N, T), jnp.float32)
    downstream = jax.random.normal(k_down, (B, N, T), jnp.float32)
    params = init_params(k_params, T, H, O)

    ref = _reference_forward(upstream, downstream, params)

    # f32 path: exact-semantics check against the pure-JAX reference.
    out_f32 = jax.block_until_ready(
        velocity_model_forward(upstream, downstream, params))
    assert out_f32.shape == (N, B), f"bad output shape {out_f32.shape}"
    assert jnp.allclose(out_f32, ref, atol=1e-4, rtol=1e-4), "f32 mismatch vs reference"

    # bf16 fast path: bf16 inputs + bf16 block-diag weights feed the MXU's
    # native bf16 pipeline (f32 accumulation).  Looser tolerance accounts for
    # bf16 weight rounding vs the f32 reference.
    up_bf16 = upstream.astype(jnp.bfloat16)
    down_bf16 = downstream.astype(jnp.bfloat16)
    out_bf16 = jax.block_until_ready(
        velocity_model_forward(up_bf16, down_bf16, params))
    ref_bf16 = _reference_forward(up_bf16.astype(jnp.float32),
                                  down_bf16.astype(jnp.float32), params)
    assert jnp.allclose(out_bf16, ref_bf16, atol=2e-2, rtol=0), "bf16 mismatch vs reference"

    print("KERNEL_OK")
</pallas_src>

<mosaic_0001>
module attributes {stable_mosaic.version = 11 : i64} {
  func.func @_velocity_kernel(%arg0: i32, %arg1: memref<32x128xf32, #tpu.memory_space<vmem>>, %arg2: memref<64x32xf32, #tpu.memory_space<vmem>>, %arg3: memref<64x1xf32, #tpu.memory_space<vmem>>, %arg4: memref<64x1xf32, #tpu.memory_space<vmem>>, %arg5: memref<64x1xf32, #tpu.memory_space<vmem>>, %arg6: memref<16x64xf32, #tpu.memory_space<vmem>>, %arg7: memref<16x1xf32, #tpu.memory_space<vmem>>, %arg8: memref<16x1xf32, #tpu.memory_space<vmem>>, %arg9: memref<1x1xf32, #tpu.memory_space<vmem>>, %arg10: memref<1x128xf32, #tpu.memory_space<vmem>>) attributes {dimension_semantics = [#tpu.dimension_semantics<parallel>], iteration_bounds = array<i64: 1>, scalar_prefetch = 0 : i64, scratch_operands = 0 : i64, tpu.core_type = #tpu.core_type<tc>, window_params = [{transform_indices = @transform_0, window_bounds = array<i64: 32, 128>}, {pipeline_mode = #tpu.pipeline_mode<synchronous>, transform_indices = @transform_1, window_bounds = array<i64: 64, 32>}, {pipeline_mode = #tpu.pipeline_mode<synchronous>, transform_indices = @transform_2, window_bounds = array<i64: 64, 1>}, {pipeline_mode = #tpu.pipeline_mode<synchronous>, transform_indices = @transform_3, window_bounds = array<i64: 64, 1>}, {pipeline_mode = #tpu.pipeline_mode<synchronous>, transform_indices = @transform_4, window_bounds = array<i64: 64, 1>}, {pipeline_mode = #tpu.pipeline_mode<synchronous>, transform_indices = @transform_5, window_bounds = array<i64: 16, 64>}, {pipeline_mode = #tpu.pipeline_mode<synchronous>, transform_indices = @transform_6, window_bounds = array<i64: 16, 1>}, {pipeline_mode = #tpu.pipeline_mode<synchronous>, transform_indices = @transform_7, window_bounds = array<i64: 16, 1>}, {pipeline_mode = #tpu.pipeline_mode<synchronous>, transform_indices = @transform_8, window_bounds = array<i64: 1, 1>}, {transform_indices = @transform_9, window_bounds = array<i64: 1, 128>}]} {
    %c0 = arith.constant 0 : index
    %c0_0 = arith.constant 0 : index
    %0 = vector.load %arg2[%c0, %c0_0] : memref<64x32xf32, #tpu.memory_space<vmem>>, vector<64x32xf32>
    %c0_1 = arith.constant 0 : index
    %c0_2 = arith.constant 0 : index
    %1 = vector.load %arg1[%c0_1, %c0_2] : memref<32x128xf32, #tpu.memory_space<vmem>>, vector<32x128xf32>
    %cst = arith.constant dense<0.000000e+00> : vector<64x128xf32>
    %2 = tpu.matmul %0, %1, %cst {dimension_numbers = #tpu.dot_dimension_numbers<[1], [0], [0], [1], [0, 0, 1, 1], [], []>} : vector<64x32xf32>, vector<32x128xf32>, vector<64x128xf32> -> vector<64x128xf32>
    %c0_3 = arith.constant 0 : index
    %c0_4 = arith.constant 0 : index
    %3 = vector.load %arg3[%c0_3, %c0_4] : memref<64x1xf32, #tpu.memory_space<vmem>>, vector<64x1xf32>
    %4 = vector.broadcast %3 : vector<64x1xf32> to vector<64x128xf32>
    %5 = arith.addf %2, %4 : vector<64x128xf32>
    %6 = vector.extract_strided_slice %5 {offsets = [0, 0], sizes = [32, 128], strides = [1, 1]} : vector<64x128xf32> to vector<32x128xf32>
    %cst_5 = arith.constant dense<0.000000e+00> : vector<128xf32>
    %7 = vector.multi_reduction <add>, %6, %cst_5 [0] : vector<32x128xf32> to vector<128xf32>
    %8 = vector.shape_cast %7 : vector<128xf32> to vector<1x128xf32>
    %cst_6 = arith.constant 3.200000e+01 : f32
    %9 = vector.broadcast %cst_6 : f32 to vector<1x128xf32>
    %10 = arith.divf %8, %9 : vector<1x128xf32>
    %11 = vector.broadcast %10 : vector<1x128xf32> to vector<32x128xf32>
    %12 = arith.subf %6, %11 : vector<32x128xf32>
    %13 = arith.mulf %12, %12 : vector<32x128xf32>
    %cst_7 = arith.constant dense<0.000000e+00> : vector<128xf32>
    %14 = vector.multi_reduction <add>, %13, %cst_7 [0] : vector<32x128xf32> to vector<128xf32>
    %15 = vector.shape_cast %14 : vector<128xf32> to vector<1x128xf32>
    %cst_8 = arith.constant 3.200000e+01 : f32
    %16 = vector.broadcast %cst_8 : f32 to vector<1x128xf32>
    %17 = arith.divf %15, %16 : vector<1x128xf32>
    %cst_9 = arith.constant 9.99999974E-6 : f32
    %18 = vector.broadcast %cst_9 : f32 to vector<1x128xf32>
    %19 = arith.addf %17, %18 : vector<1x128xf32>
    %20 = math.rsqrt %19 : vector<1x128xf32>
    %21 = vector.broadcast %20 : vector<1x128xf32> to vector<32x128xf32>
    %22 = arith.mulf %12, %21 : vector<32x128xf32>
    %23 = vector.extract_strided_slice %5 {offsets = [32, 0], sizes = [32, 128], strides = [1, 1]} : vector<64x128xf32> to vector<32x128xf32>
    %cst_10 = arith.constant dense<0.000000e+00> : vector<128xf32>
    %24 = vector.multi_reduction <add>, %23, %cst_10 [0] : vector<32x128xf32> to vector<128xf32>
    %25 = vector.shape_cast %24 : vector<128xf32> to vector<1x128xf32>
    %cst_11 = arith.constant 3.200000e+01 : f32
    %26 = vector.broadcast %cst_11 : f32 to vector<1x128xf32>
    %27 = arith.divf %25, %26 : vector<1x128xf32>
    %28 = vector.broadcast %27 : vector<1x128xf32> to vector<32x128xf32>
    %29 = arith.subf %23, %28 : vector<32x128xf32>
    %30 = arith.mulf %29, %29 : vector<32x128xf32>
    %cst_12 = arith.constant dense<0.000000e+00> : vector<128xf32>
    %31 = vector.multi_reduction <add>, %30, %cst_12 [0] : vector<32x128xf32> to vector<128xf32>
    %32 = vector.shape_cast %31 : vector<128xf32> to vector<1x128xf32>
    %cst_13 = arith.constant 3.200000e+01 : f32
    %33 = vector.broadcast %cst_13 : f32 to vector<1x128xf32>
    %34 = arith.divf %32, %33 : vector<1x128xf32>
    %cst_14 = arith.constant 9.99999974E-6 : f32
    %35 = vector.broadcast %cst_14 : f32 to vector<1x128xf32>
    %36 = arith.addf %34, %35 : vector<1x128xf32>
    %37 = math.rsqrt %36 : vector<1x128xf32>
    %38 = vector.broadcast %37 : vector<1x128xf32> to vector<32x128xf32>
    %39 = arith.mulf %29, %38 : vector<32x128xf32>
    %40 = tpu.concatenate %22, %39 in 0 : vector<32x128xf32>, vector<32x128xf32> -> vector<64x128xf32>
    %c0_15 = arith.constant 0 : index
    %c0_16 = arith.constant 0 : index
    %41 = vector.load %arg4[%c0_15, %c0_16] : memref<64x1xf32, #tpu.memory_space<vmem>>, vector<64x1xf32>
    %42 = vector.broadcast %41 : vector<64x1xf32> to vector<64x128xf32>
    %43 = arith.mulf %40, %42 : vector<64x128xf32>
    %c0_17 = arith.constant 0 : index
    %c0_18 = arith.constant 0 : index
    %44 = vector.load %arg5[%c0_17, %c0_18] : memref<64x1xf32, #tpu.memory_space<vmem>>, vector<64x1xf32>
    %45 = vector.broadcast %44 : vector<64x1xf32> to vector<64x128xf32>
    %46 = arith.addf %43, %45 : vector<64x128xf32>
    %cst_19 = arith.constant 0.000000e+00 : f32
    %47 = vector.broadcast %cst_19 : f32 to vector<64x128xf32>
    %48 = arith.maximumf %46, %47 : vector<64x128xf32>
    %c0_20 = arith.constant 0 : index
    %c0_21 = arith.constant 0 : index
    %49 = vector.load %arg6[%c0_20, %c0_21] : memref<16x64xf32, #tpu.memory_space<vmem>>, vector<16x64xf32>
    %cst_22 = arith.constant dense<0.000000e+00> : vector<16x128xf32>
    %50 = tpu.matmul %49, %48, %cst_22 {dimension_numbers = #tpu.dot_dimension_numbers<[1], [0], [0], [1], [0, 0, 1, 1], [], []>} : vector<16x64xf32>, vector<64x128xf32>, vector<16x128xf32> -> vector<16x128xf32>
    %c0_23 = arith.constant 0 : index
    %c0_24 = arith.constant 0 : index
    %51 = vector.load %arg7[%c0_23, %c0_24] : memref<16x1xf32, #tpu.memory_space<vmem>>, vector<16x1xf32>
    %52 = vector.broadcast %51 : vector<16x1xf32> to vector<16x128xf32>
    %53 = arith.addf %50, %52 : vector<16x128xf32>
    %54 = arith.negf %53 : vector<16x128xf32>
    %55 = math.exp %54 : vector<16x128xf32>
    %cst_25 = arith.constant 1.000000e+00 : f32
    %56 = vector.broadcast %cst_25 : f32 to vector<16x128xf32>
    %57 = arith.addf %56, %55 : vector<16x128xf32>
    %58 = arith.divf %56, %57 : vector<16x128xf32>
    %c0_26 = arith.constant 0 : index
    %c0_27 = arith.constant 0 : index
    %59 = vector.load %arg8[%c0_26, %c0_27] : memref<16x1xf32, #tpu.memory_space<vmem>>, vector<16x1xf32>
    %60 = vector.broadcast %59 : vector<16x1xf32> to vector<16x128xf32>
    %61 = arith.mulf %60, %58 : vector<16x128xf32>
    %cst_28 = arith.constant dense<0.000000e+00> : vector<128xf32>
    %62 = vector.multi_reduction <add>, %61, %cst_28 [0] : vector<16x128xf32> to vector<128xf32>
    %63 = vector.shape_cast %62 : vector<128xf32> to vector<1x128xf32>
    %c0_29 = arith.constant 0 : index
    %c0_30 = arith.constant 0 : index
    %64 = vector.load %arg9[%c0_29, %c0_30] : memref<1x1xf32, #tpu.memory_space<vmem>>, vector<1x1xf32>
    %65 = vector.broadcast %64 : vector<1x1xf32> to vector<1x128xf32>
    %66 = arith.addf %63, %65 : vector<1x128xf32>
    %c0_31 = arith.constant 0 : index
    %c0_32 = arith.constant 0 : index
    %67 = vector.load %arg10[%c0_31, %c0_32] : memref<1x128xf32, #tpu.memory_space<vmem>>, vector<1x128xf32>
    tpu.vector_store %arg10[%c0_31, %c0_32], %66 {strides = array<i32>} : memref<1x128xf32, #tpu.memory_space<vmem>>, vector<1x128xf32>,
    return
  }
  func.func @transform_0(%arg0: i32) -> (i32, i32) {
    %c0_i32 = arith.constant 0 : i32
    %c0_i32_0 = arith.constant 0 : i32
    return %c0_i32, %arg0 : i32, i32
  }
  func.func @transform_1(%arg0: i32) -> (i32, i32) {
    %c0_i32 = arith.constant 0 : i32
    %c0_i32_0 = arith.constant 0 : i32
    %c0_i32_1 = arith.constant 0 : i32
    return %c0_i32, %c0_i32_0 : i32, i32
  }
  func.func @transform_2(%arg0: i32) -> (i32, i32) {
    %c0_i32 = arith.constant 0 : i32
    %c0_i32_0 = arith.constant 0 : i32
    %c0_i32_1 = arith.constant 0 : i32
    return %c0_i32, %c0_i32_0 : i32, i32
  }
  func.func @transform_3(%arg0: i32) -> (i32, i32) {
    %c0_i32 = arith.constant 0 : i32
    %c0_i32_0 = arith.constant 0 : i32
    %c0_i32_1 = arith.constant 0 : i32
    return %c0_i32, %c0_i32_0 : i32, i32
  }
  func.func @transform_4(%arg0: i32) -> (i32, i32) {
    %c0_i32 = arith.constant 0 : i32
    %c0_i32_0 = arith.constant 0 : i32
    %c0_i32_1 = arith.constant 0 : i32
    return %c0_i32, %c0_i32_0 : i32, i32
  }
  func.func @transform_5(%arg0: i32) -> (i32, i32) {
    %c0_i32 = arith.constant 0 : i32
    %c0_i32_0 = arith.constant 0 : i32
    %c0_i32_1 = arith.constant 0 : i32
    return %c0_i32, %c0_i32_0 : i32, i32
  }
  func.func @transform_6(%arg0: i32) -> (i32, i32) {
    %c0_i32 = arith.constant 0 : i32
    %c0_i32_0 = arith.constant 0 : i32
    %c0_i32_1 = arith.constant 0 : i32
    return %c0_i32, %c0_i32_0 : i32, i32
  }
  func.func @transform_7(%arg0: i32) -> (i32, i32) {
    %c0_i32 = arith.constant 0 : i32
    %c0_i32_0 = arith.constant 0 : i32
    %c0_i32_1 = arith.constant 0 : i32
    return %c0_i32, %c0_i32_0 : i32, i32
  }
  func.func @transform_8(%arg0: i32) -> (i32, i32) {
    %c0_i32 = arith.constant 0 : i32
    %c0_i32_0 = arith.constant 0 : i32
    %c0_i32_1 = arith.constant 0 : i32
    return %c0_i32, %c0_i32_0 : i32, i32
  }
  func.func @transform_9(%arg0: i32) -> (i32, i32) {
    %c0_i32 = arith.constant 0 : i32
    %c0_i32_0 = arith.constant 0 : i32
    return %c0_i32, %arg0 : i32, i32
  }
}

</mosaic_0001>

<llo_original>
// kernel: tpu_custom_call.1
$region0: #{tpu_custom_call.1}
  #allocation0 [shape = 'u32[]', space=smem, size = 0x4, offset = 0x4, fixed_abs, tag = 'smem constant byte address 0x4 - core index']
  #allocation1 [shape = 'u32[144,128]{1,0:T(1,128)}', space=vmem, size = 0x12000, scoped, tag = 'internal scratch']
  #allocation2 [shape = 'f32[1,1]{1,0:T(1,128)S(1)}', space=vmem, size = 0x200, scoped, tag = 'scoped memory for tpu_custom_call.1']
  %s0 = inlined_call_operand.vmem [shape: f32[32,128], index: 0, kind: input, shape index: {}]
  %s1 = inlined_call_operand.vmem [shape: f32[64,32], index: 1, kind: input, shape index: {}]
  %s2 = inlined_call_operand.vmem [shape: f32[64,1], index: 2, kind: input, shape index: {}]
  %s3 = inlined_call_operand.vmem [shape: f32[64,1], index: 3, kind: input, shape index: {}]
  %s4 = inlined_call_operand.vmem [shape: f32[64,1], index: 4, kind: input, shape index: {}]
  %s5 = inlined_call_operand.vmem [shape: f32[16,64], index: 5, kind: input, shape index: {}]
  %s6 = inlined_call_operand.vmem [shape: f32[16,1], index: 6, kind: input, shape index: {}]
  %s7 = inlined_call_operand.vmem [shape: f32[16,1], index: 7, kind: input, shape index: {}]
  %s8 = inlined_call_operand.<no memory space> [shape: f32[1,1], index: 8, kind: input, shape index: {}]
  %s9 = inlined_call_operand.hbm [shape: f32[1,128], index: 9, kind: output, shape index: {}]
  %s10 = sld [smem:[#allocation0]]
  $region46: #{tpu_custom_call.1} parent=0
    _
  %s12 = ssub.s32 1, %s10
  %s13 = scalar_select 0, %s12, %s10
  %v14 = vstv %s8
  %15 = vst [vmem:[#allocation2] sm:$0x1] %v14
  $region1: #{tpu_custom_call.1} parent=0
    #allocation3 [shape = 'u8[512]{0}', space=vmem, size = 0x400, scoped, tag = 'output window, operand 0, single buffered']
    #allocation4 [shape = 's32[1]{0}', space=sflag, size = 0x4, scoped, tag = 'scoped memory for tpu_custom_call.1']
    %16 = vsyncpa [#allocation4], 0
    // Predicated region
    $region2: #{tpu_custom_call.1} parent=1 // pred_check
      _
    $region3: #{tpu_custom_call.1} parent=1 // pred_check_branch
      %18 = sbr.rel (0) target = $region5
    $region4: #{tpu_custom_call.1} parent=1 // pred_region
      _
    $region5: #{tpu_custom_call.1} parent=1 // pred_fallthru
      _
    // Predicated region
    $region6: #{tpu_custom_call.1} parent=1 // pred_check
      _
    $region7: #{tpu_custom_call.1} parent=1 // pred_check_branch
      %20 = sbr.rel (0) target = $region9
    $region8: #{tpu_custom_call.1} parent=1 // pred_region
      _
    $region9: #{tpu_custom_call.1} parent=1 // pred_fallthru
      _
    // Predicated region
    $region10: #{tpu_custom_call.1} parent=1 // pred_check
      _
    $region11: #{tpu_custom_call.1} parent=1 // pred_check_branch
      %22 = sbr.rel (0) target = $region13
    $region12: #{tpu_custom_call.1} parent=1 // pred_region
      _
    $region13: #{tpu_custom_call.1} parent=1 // pred_fallthru
      _
    // Predicated region
    $region14: #{tpu_custom_call.1} parent=1 // pred_check
      _
    $region15: #{tpu_custom_call.1} parent=1 // pred_check_branch
      %24 = sbr.rel (0) target = $region17
    $region16: #{tpu_custom_call.1} parent=1 // pred_region
      _
    $region17: #{tpu_custom_call.1} parent=1 // pred_fallthru
      _
    // Predicated region
    $region18: #{tpu_custom_call.1} parent=1 // pred_check
      _
    $region19: #{tpu_custom_call.1} parent=1 // pred_check_branch
      %26 = sbr.rel (0) target = $region21
    $region20: #{tpu_custom_call.1} parent=1 // pred_region
      _
    $region21: #{tpu_custom_call.1} parent=1 // pred_fallthru
      _
    // Predicated region
    $region22: #{tpu_custom_call.1} parent=1 // pred_check
      _
    $region23: #{tpu_custom_call.1} parent=1 // pred_check_branch
      %28 = sbr.rel (0) target = $region25
    $region24: #{tpu_custom_call.1} parent=1 // pred_region
      _
    $region25: #{tpu_custom_call.1} parent=1 // pred_fallthru
      _
    // Predicated region
    $region26: #{tpu_custom_call.1} parent=1 // pred_check
      _
    $region27: #{tpu_custom_call.1} parent=1 // pred_check_branch
      %30 = sbr.rel (0) target = $region29
    $region28: #{tpu_custom_call.1} parent=1 // pred_region
      _
    $region29: #{tpu_custom_call.1} parent=1 // pred_fallthru
      _
    // Predicated region
    $region30: #{tpu_custom_call.1} parent=1 // pred_check
      _
    $region31: #{tpu_custom_call.1} parent=1 // pred_check_branch
      %32 = sbr.rel (0) target = $region33
    $region32: #{tpu_custom_call.1} parent=1 // pred_region
      _
    $region33: #{tpu_custom_call.1} parent=1 // pred_fallthru
      _
    // Predicated region
    $region34: #{tpu_custom_call.1} parent=1 // pred_check
      _
    $region35: #{tpu_custom_call.1} parent=1 // pred_check_branch
      %34 = sbr.rel (0) target = $region37
    $region36: #{tpu_custom_call.1} parent=1 // pred_region
      _
    $region37: #{tpu_custom_call.1} parent=1 // pred_fallthru
      _
    %v35 = vld [vmem:[%s1] sm:$0xff]
    %v36 = vld [vmem:[%s1 + $0x8] sm:$0xff]
    %v37 = vld [vmem:[%s1 + $0x10] sm:$0xff]
    %v38 = vld [vmem:[%s1 + $0x18] sm:$0xff]
    %v39 = vld [vmem:[%s1 + $0x20] sm:$0xff]
    %v40 = vld [vmem:[%s1 + $0x28] sm:$0xff]
    %v41 = vld [vmem:[%s1 + $0x30] sm:$0xff]
    %v42 = vld [vmem:[%s1 + $0x38] sm:$0xff]
    %v43 = vld [vmem:[%s0] sm:$0xff]
    %v44 = vld [vmem:[%s0 + $0x8] sm:$0xff]
    %v45 = vld [vmem:[%s0 + $0x10] sm:$0xff]
    %v46 = vld [vmem:[%s0 + $0x18] sm:$0xff]
    %v47 = vld [vmem:[%s2] sm:$0xff]
    %v48 = vld [vmem:[%s2 + $0x8] sm:$0xff]
    %v49 = vld [vmem:[%s2 + $0x10] sm:$0xff]
    %v50 = vld [vmem:[%s2 + $0x18] sm:$0xff]
    %v51 = vld [vmem:[%s2 + $0x20] sm:$0xff]
    %v52 = vld [vmem:[%s2 + $0x28] sm:$0xff]
    %v53 = vld [vmem:[%s2 + $0x30] sm:$0xff]
    %v54 = vld [vmem:[%s2 + $0x38] sm:$0xff]
    %56 = vset.pattern.permute.xlu0 0
    %57 = vperm.xlu0 %56, %v47
    %v58 = vpop.permute.xlu0 %57
    %61 = vset.pattern.permute.xlu0 0
    %62 = vperm.xlu0 %61, %v48
    %v63 = vpop.permute.xlu0 %62
    %66 = vset.pattern.permute.xlu0 0
    %67 = vperm.xlu0 %66, %v49
    %v68 = vpop.permute.xlu0 %67
    %71 = vset.pattern.permute.xlu0 0
    %72 = vperm.xlu0 %71, %v50
    %v73 = vpop.permute.xlu0 %72
    %76 = vset.pattern.permute.xlu0 0
    %77 = vperm.xlu0 %76, %v51
    %v78 = vpop.permute.xlu0 %77
    %81 = vset.pattern.permute.xlu0 0
    %82 = vperm.xlu0 %81, %v52
    %v83 = vpop.permute.xlu0 %82
    %86 = vset.pattern.permute.xlu0 0
    %87 = vperm.xlu0 %86, %v53
    %v88 = vpop.permute.xlu0 %87
    %91 = vset.pattern.permute.xlu0 0
    %92 = vperm.xlu0 %91, %v54
    %v93 = vpop.permute.xlu0 %92
    %vm95 = vcmask 261120
    %v97 = vsel %vm95, %v35, 0
    %v100 = vsel %vm95, %v36, 0
    %v103 = vsel %vm95, %v37, 0
    %v106 = vsel %vm95, %v38, 0
    %v109 = vsel %vm95, %v39, 0
    %v112 = vsel %vm95, %v40, 0
    %v115 = vsel %vm95, %v41, 0
    %v118 = vsel %vm95, %v42, 0
    %120 = vmatprep.subr.mxu0 0.0
    %121 = vmatpush1.msra.mxu0 0.0
    %122 = vmatprep.subr.mxu0 0.0
    %123 = vmatpush1.msra.mxu0 0.0
    %124 = vmatprep.subr.mxu0 0.0
    %125 = vmatpush1.msra.mxu0 0.0
    %126 = vmatprep.subr.mxu0 0.0
    %127 = vmatpush1.msra.mxu0 0.0
    %128 = vmatprep.subr.mxu0 0.0
    %129 = vmatpush1.msra.mxu0 0.0
    %130 = vmatprep.subr.mxu0 0.0
    %131 = vmatpush1.msra.mxu0 0.0
    %132 = vmatprep.subr.mxu0 0.0
    %133 = vmatpush1.msra.mxu0 0.0
    %134 = vmatprep.subr.mxu0 0.0
    %135 = vmatpush1.msra.mxu0 0.0
    %136 = vmatprep.subr.mxu0 0.0
    %137 = vmatpush1.msra.mxu0 0.0
    %138 = vmatprep.subr.mxu0 0.0
    %139 = vmatpush1.msra.mxu0 0.0
    %140 = vmatprep.subr.mxu0 0.0
    %141 = vmatpush1.msra.mxu0 0.0
    %142 = vmatprep.subr.mxu0 0.0
    %143 = vmatpush1.msra.mxu0 0.0
    %144 = vmatprep.subr.mxu0 0.0
    %145 = vmatpush1.msra.mxu0 %v46
    %146 = vmatprep.subr.mxu0 0.0
    %147 = vmatpush1.msra.mxu0 %v45
    %148 = vmatprep.subr.mxu0 0.0
    %149 = vmatpush1.msra.mxu0 %v44
    %150 = vmatprep.subr.mxu0 0.0
    %151 = vmatpush1.msra.mxu0 %v43
    %152 = vmatprep.subr.mxu0 0.0
    %153 = vmatpush2.msra.mxu0 0.0
    %154 = vmatprep.subr.mxu0 0.0
    %155 = vmatpush2.msra.mxu0 0.0
    %156 = vmatprep.subr.mxu0 0.0
    %157 = vmatpush2.msra.mxu0 0.0
    %158 = vmatprep.subr.mxu0 0.0
    %159 = vmatpush2.msra.mxu0 0.0
    %160 = vmatprep.subr.mxu0 0.0
    %161 = vmatpush2.msra.mxu0 0.0
    %162 = vmatprep.subr.mxu0 0.0
    %163 = vmatpush2.msra.mxu0 0.0
    %164 = vmatprep.subr.mxu0 0.0
    %165 = vmatpush2.msra.mxu0 0.0
    %166 = vmatprep.subr.mxu0 0.0
    %167 = vmatpush2.msra.mxu0 0.0
    %168 = vmatprep.subr.mxu0 0.0
    %169 = vmatpush2.msra.mxu0 0.0
    %170 = vmatprep.subr.mxu0 0.0
    %171 = vmatpush2.msra.mxu0 0.0
    %172 = vmatprep.subr.mxu0 0.0
    %173 = vmatpush2.msra.mxu0 0.0
    %174 = vmatprep.subr.mxu0 0.0
    %175 = vmatpush2.msra.mxu0 0.0
    %176 = vmatprep.subr.mxu0 0.0
    %177 = vmatpush2.msra.mxu0 0.0
    %178 = vmatprep.subr.mxu0 0.0
    %179 = vmatpush2.msra.mxu0 0.0
    %180 = vmatprep.subr.mxu0 0.0
    %181 = vmatpush2.msra.mxu0 0.0
    %182 = vmatprep.subr.mxu0 0.0
    %183 = vmatpush2.msra.mxu0 0.0
    %184 = vmatprep.mubr.f32.mxu0 0.0
    %185 = vmatmul.mubr.f32.gmra.mxu0 %v97
    %v186 = vpop.f32.mrf.mxu0
    %v187 = vadd.f32 %v58, %v186
    %v188 = vpop.f32.mrf.mxu0
    %189 = vmatprep.mubr.f32.mxu0 0.0
    %190 = vmatmul.mubr.f32.gmra.mxu0 %v100
    %v191 = vpop.f32.mrf.mxu0
    %v192 = vadd.f32 %v63, %v191
    %v193 = vpop.f32.mrf.mxu0
    %194 = vmatprep.mubr.f32.mxu0 0.0
    %195 = vmatmul.mubr.f32.gmra.mxu0 %v103
    %v196 = vpop.f32.mrf.mxu0
    %v197 = vadd.f32 %v68, %v196
    %v198 = vpop.f32.mrf.mxu0
    %199 = vmatprep.mubr.f32.mxu0 0.0
    %200 = vmatmul.mubr.f32.gmra.mxu0 %v106
    %v201 = vpop.f32.mrf.mxu0
    %v202 = vadd.f32 %v73, %v201
    %v203 = vpop.f32.mrf.mxu0
    %204 = vmatprep.mubr.f32.mxu0 0.0
    %205 = vmatmul.mubr.f32.gmra.mxu0 %v109
    %v206 = vpop.f32.mrf.mxu0
    %v207 = vadd.f32 %v78, %v206
    %v208 = vpop.f32.mrf.mxu0
    %209 = vmatprep.mubr.f32.mxu0 0.0
    %210 = vmatmul.mubr.f32.gmra.mxu0 %v112
    %v211 = vpop.f32.mrf.mxu0
    %v212 = vadd.f32 %v83, %v211
    %v213 = vpop.f32.mrf.mxu0
    %214 = vmatprep.mubr.f32.mxu0 0.0
    %215 = vmatmul.mubr.f32.gmra.mxu0 %v115
    %v216 = vpop.f32.mrf.mxu0
    %v217 = vadd.f32 %v88, %v216
    %v218 = vpop.f32.mrf.mxu0
    %219 = vmatprep.mubr.f32.mxu0 0.0
    %220 = vmatmul.mubr.f32.gmra.mxu0 %v118
    %v221 = vpop.f32.mrf.mxu0
    %v222 = vadd.f32 %v93, %v221
    %v223 = vpop.f32.mrf.mxu0
    %224 = vdwg.mxu0
    %v225 = vadd.f32 %v187, %v192
    %v226 = vadd.f32 %v225, %v197
    %v227 = vadd.f32 %v226, %v202
    %v228 = vrot.slane %v227, 4
    %v229 = vadd.f32 %v227, %v228
    %v230 = vrot.slane %v229, 2
    %v231 = vadd.f32 %v229, %v230
    %v232 = vrot.slane %v231, 1
    %v233 = vadd.f32 %v231, %v232
    %v234 = vrcp.pop 32.0
    %v235 = vmul.f32 %v233, %v234
    %v236 = vsub.f32 %v187, %v235
    %v237 = vsub.f32 %v192, %v235
    %v238 = vsub.f32 %v197, %v235
    %v239 = vsub.f32 %v202, %v235
    %v240 = vmul.f32 %v236, %v236
    %v241 = vmul.f32 %v237, %v237
    %v242 = vmul.f32 %v238, %v238
    %v243 = vmul.f32 %v239, %v239
    %v244 = vadd.f32 %v240, %v241
    %v245 = vadd.f32 %v244, %v242
    %v246 = vadd.f32 %v245, %v243
    %v247 = vrot.slane %v246, 4
    %v248 = vadd.f32 %v246, %v247
    %v249 = vrot.slane %v248, 2
    %v250 = vadd.f32 %v248, %v249
    %v251 = vrot.slane %v250, 1
    %v252 = vadd.f32 %v250, %v251
    %v253 = vmul.f32 %v252, %v234
    %v254 = vadd.f32 %v253, 1e-05
    %v255 = vrsqrt.pop %v254
    %v256 = vmul.f32 %v236, %v255
    %v257 = vmul.f32 %v237, %v255
    %v258 = vmul.f32 %v238, %v255
    %v259 = vmul.f32 %v239, %v255
    %v260 = vadd.f32 %v207, %v212
    %v261 = vadd.f32 %v260, %v217
    %v262 = vadd.f32 %v261, %v222
    %v263 = vrot.slane %v262, 4
    %v264 = vadd.f32 %v262, %v263
    %v265 = vrot.slane %v264, 2
    %v266 = vadd.f32 %v264, %v265
    %v267 = vrot.slane %v266, 1
    %v268 = vadd.f32 %v266, %v267
    %v269 = vmul.f32 %v268, %v234
    %v270 = vsub.f32 %v207, %v269
    %v271 = vsub.f32 %v212, %v269
    %v272 = vsub.f32 %v217, %v269
    %v273 = vsub.f32 %v222, %v269
    %v274 = vmul.f32 %v270, %v270
    %v275 = vmul.f32 %v271, %v271
    %v276 = vmul.f32 %v272, %v272
    %v277 = vmul.f32 %v273, %v273
    %v278 = vadd.f32 %v274, %v275
    %v279 = vadd.f32 %v278, %v276
    %v280 = vadd.f32 %v279, %v277
    %v281 = vrot.slane %v280, 4
    %v282 = vadd.f32 %v280, %v281
    %v283 = vrot.slane %v282, 2
    %v284 = vadd.f32 %v282, %v283
    %v285 = vrot.slane %v284, 1
    %v286 = vadd.f32 %v284, %v285
    %v287 = vmul.f32 %v286, %v234
    %v288 = vadd.f32 %v287, 1e-05
    %v289 = vrsqrt.pop %v288
    %v290 = vmul.f32 %v270, %v289
    %v291 = vmul.f32 %v271, %v289
    %v292 = vmul.f32 %v272, %v289
    %v293 = vmul.f32 %v273, %v289
    %v294 = vld [vmem:[%s3] sm:$0xff]
    %v295 = vld [vmem:[%s3 + $0x8] sm:$0xff]
    %v296 = vld [vmem:[%s3 + $0x10] sm:$0xff]
    %v297 = vld [vmem:[%s3 + $0x18] sm:$0xff]
    %v298 = vld [vmem:[%s3 + $0x20] sm:$0xff]
    %v299 = vld [vmem:[%s3 + $0x28] sm:$0xff]
    %v300 = vld [vmem:[%s3 + $0x30] sm:$0xff]
    %v301 = vld [vmem:[%s3 + $0x38] sm:$0xff]
    %303 = vset.pattern.permute.xlu0 0
    %304 = vperm.xlu0 %303, %v294
    %v305 = vpop.permute.xlu0 %304
    %308 = vset.pattern.permute.xlu0 0
    %309 = vperm.xlu0 %308, %v295
    %v310 = vpop.permute.xlu0 %309
    %313 = vset.pattern.permute.xlu0 0
    %314 = vperm.xlu0 %313, %v296
    %v315 = vpop.permute.xlu0 %314
    %318 = vset.pattern.permute.xlu0 0
    %319 = vperm.xlu0 %318, %v297
    %v320 = vpop.permute.xlu0 %319
    %323 = vset.pattern.permute.xlu0 0
    %324 = vperm.xlu0 %323, %v298
    %v325 = vpop.permute.xlu0 %324
    %328 = vset.pattern.permute.xlu0 0
    %329 = vperm.xlu0 %328, %v299
    %v330 = vpop.permute.xlu0 %329
    %333 = vset.pattern.permute.xlu0 0
    %334 = vperm.xlu0 %333, %v300
    %v335 = vpop.permute.xlu0 %334
    %338 = vset.pattern.permute.xlu0 0
    %339 = vperm.xlu0 %338, %v301
    %v340 = vpop.permute.xlu0 %339
    %v342 = vmul.f32 %v256, %v305
    %v343 = vmul.f32 %v257, %v310
    %v344 = vmul.f32 %v258, %v315
    %v345 = vmul.f32 %v259, %v320
    %v346 = vmul.f32 %v290, %v325
    %v347 = vmul.f32 %v291, %v330
    %v348 = vmul.f32 %v292, %v335
    %v349 = vmul.f32 %v293, %v340
    %v350 = vld [vmem:[%s4] sm:$0xff]
    %v351 = vld [vmem:[%s4 + $0x8] sm:$0xff]
    %v352 = vld [vmem:[%s4 + $0x10] sm:$0xff]
    %v353 = vld [vmem:[%s4 + $0x18] sm:$0xff]
    %v354 = vld [vmem:[%s4 + $0x20] sm:$0xff]
    %v355 = vld [vmem:[%s4 + $0x28] sm:$0xff]
    %v356 = vld [vmem:[%s4 + $0x30] sm:$0xff]
    %v357 = vld [vmem:[%s4 + $0x38] sm:$0xff]
    %359 = vset.pattern.permute.xlu0 0
    %360 = vperm.xlu0 %359, %v350
    %v361 = vpop.permute.xlu0 %360
    %364 = vset.pattern.permute.xlu0 0
    %365 = vperm.xlu0 %364, %v351
    %v366 = vpop.permute.xlu0 %365
    %369 = vset.pattern.permute.xlu0 0
    %370 = vperm.xlu0 %369, %v352
    %v371 = vpop.permute.xlu0 %370
    %374 = vset.pattern.permute.xlu0 0
    %375 = vperm.xlu0 %374, %v353
    %v376 = vpop.permute.xlu0 %375
    %379 = vset.pattern.permute.xlu0 0
    %380 = vperm.xlu0 %379, %v354
    %v381 = vpop.permute.xlu0 %380
    %384 = vset.pattern.permute.xlu0 0
    %385 = vperm.xlu0 %384, %v355
    %v386 = vpop.permute.xlu0 %385
    %389 = vset.pattern.permute.xlu0 0
    %390 = vperm.xlu0 %389, %v356
    %v391 = vpop.permute.xlu0 %390
    %394 = vset.pattern.permute.xlu0 0
    %395 = vperm.xlu0 %394, %v357
    %v396 = vpop.permute.xlu0 %395
    %v398 = vadd.f32 %v342, %v361
    %v399 = vadd.f32 %v343, %v366
    %v400 = vadd.f32 %v344, %v371
    %v401 = vadd.f32 %v345, %v376
    %v402 = vadd.f32 %v346, %v381
    %v403 = vadd.f32 %v347, %v386
    %v404 = vadd.f32 %v348, %v391
    %v405 = vadd.f32 %v349, %v396
    %v406 = vmax.f32 %v398, 0.0
    %v407 = vmax.f32 %v399, 0.0
    %v408 = vmax.f32 %v400, 0.0
    %v409 = vmax.f32 %v401, 0.0
    %v410 = vmax.f32 %v402, 0.0
    %v411 = vmax.f32 %v403, 0.0
    %v412 = vmax.f32 %v404, 0.0
    %v413 = vmax.f32 %v405, 0.0
    %v414 = vld [vmem:[%s5] sm:$0xff]
    %v415 = vld [vmem:[%s5 + $0x8] sm:$0xff]
    %v416 = vld [vmem:[%s6] sm:$0xff]
    %v417 = vld [vmem:[%s6 + $0x8] sm:$0xff]
    %419 = vset.pattern.permute.xlu0 0
    %420 = vperm.xlu0 %419, %v416
    %v421 = vpop.permute.xlu0 %420
    %424 = vset.pattern.permute.xlu0 0
    %425 = vperm.xlu0 %424, %v417
    %v426 = vpop.permute.xlu0 %425
    %vm428 = vcmask 523264
    %v430 = vsel %vm428, %v414, 0
    %v433 = vsel %vm428, %v415, 0
    %435 = vmatprep.subr.mxu0 0.0
    %436 = vmatpush1.msra.mxu0 0.0
    %437 = vmatprep.subr.mxu0 0.0
    %438 = vmatpush1.msra.mxu0 0.0
    %439 = vmatprep.subr.mxu0 0.0
    %440 = vmatpush1.msra.mxu0 0.0
    %441 = vmatprep.subr.mxu0 0.0
    %442 = vmatpush1.msra.mxu0 0.0
    %443 = vmatprep.subr.mxu0 0.0
    %444 = vmatpush1.msra.mxu0 0.0
    %445 = vmatprep.subr.mxu0 0.0
    %446 = vmatpush1.msra.mxu0 0.0
    %447 = vmatprep.subr.mxu0 0.0
    %448 = vmatpush1.msra.mxu0 0.0
    %449 = vmatprep.subr.mxu0 0.0
    %450 = vmatpush1.msra.mxu0 0.0
    %451 = vmatprep.subr.mxu0 0.0
    %452 = vmatpush1.msra.mxu0 %v413
    %453 = vmatprep.subr.mxu0 0.0
    %454 = vmatpush1.msra.mxu0 %v412
    %455 = vmatprep.subr.mxu0 0.0
    %456 = vmatpush1.msra.mxu0 %v411
    %457 = vmatprep.subr.mxu0 0.0
    %458 = vmatpush1.msra.mxu0 %v410
    %459 = vmatprep.subr.mxu0 0.0
    %460 = vmatpush1.msra.mxu0 %v409
    %461 = vmatprep.subr.mxu0 0.0
    %462 = vmatpush1.msra.mxu0 %v408
    %463 = vmatprep.subr.mxu0 0.0
    %464 = vmatpush1.msra.mxu0 %v407
    %465 = vmatprep.subr.mxu0 0.0
    %466 = vmatpush1.msra.mxu0 %v406
    %467 = vmatprep.subr.mxu0 0.0
    %468 = vmatpush2.msra.mxu0 0.0
    %469 = vmatprep.subr.mxu0 0.0
    %470 = vmatpush2.msra.mxu0 0.0
    %471 = vmatprep.subr.mxu0 0.0
    %472 = vmatpush2.msra.mxu0 0.0
    %473 = vmatprep.subr.mxu0 0.0
    %474 = vmatpush2.msra.mxu0 0.0
    %475 = vmatprep.subr.mxu0 0.0
    %476 = vmatpush2.msra.mxu0 0.0
    %477 = vmatprep.subr.mxu0 0.0
    %478 = vmatpush2.msra.mxu0 0.0
    %479 = vmatprep.subr.mxu0 0.0
    %480 = vmatpush2.msra.mxu0 0.0
    %481 = vmatprep.subr.mxu0 0.0
    %482 = vmatpush2.msra.mxu0 0.0
    %483 = vmatprep.subr.mxu0 0.0
    %484 = vmatpush2.msra.mxu0 0.0
    %485 = vmatprep.subr.mxu0 0.0
    %486 = vmatpush2.msra.mxu0 0.0
    %487 = vmatprep.subr.mxu0 0.0
    %488 = vmatpush2.msra.mxu0 0.0
    %489 = vmatprep.subr.mxu0 0.0
    %490 = vmatpush2.msra.mxu0 0.0
    %491 = vmatprep.subr.mxu0 0.0
    %492 = vmatpush2.msra.mxu0 0.0
    %493 = vmatprep.subr.mxu0 0.0
    %494 = vmatpush2.msra.mxu0 0.0
    %495 = vmatprep.subr.mxu0 0.0
    %496 = vmatpush2.msra.mxu0 0.0
    %497 = vmatprep.subr.mxu0 0.0
    %498 = vmatpush2.msra.mxu0 0.0
    %499 = vmatprep.mubr.f32.mxu0 0.0
    %500 = vmatmul.mubr.f32.gmra.mxu0 %v430
    %v501 = vpop.f32.mrf.mxu0
    %v502 = vadd.f32 %v421, %v501
    %v503 = vpop.f32.mrf.mxu0
    %504 = vmatprep.mubr.f32.mxu0 0.0
    %505 = vmatmul.mubr.f32.gmra.mxu0 %v433
    %v506 = vpop.f32.mrf.mxu0
    %v507 = vadd.f32 %v426, %v506
    %v508 = vpop.f32.mrf.mxu0
    %509 = vdwg.mxu0
    %v510 = vxor.u32 %v502, 2147483648
    %v511 = vxor.u32 %v507, 2147483648
    %v512 = vmul.f32 %v510, 1.442695
    %v513 = vpow.pop %v512
    %v514 = vmul.f32 %v511, 1.442695
    %v515 = vpow.pop %v514
    %v516 = vadd.f32 %v513, 1.0
    %v517 = vadd.f32 %v515, 1.0
    %v518 = vrcp.pop %v516
    %v519 = vmul.f32 1.0, %v518
    %v520 = vrcp.pop %v517
    %v521 = vmul.f32 1.0, %v520
    %v522 = vld [vmem:[%s7] sm:$0xff]
    %v523 = vld [vmem:[%s7 + $0x8] sm:$0xff]
    %525 = vset.pattern.permute.xlu0 0
    %526 = vperm.xlu0 %525, %v522
    %v527 = vpop.permute.xlu0 %526
    %530 = vset.pattern.permute.xlu0 0
    %531 = vperm.xlu0 %530, %v523
    %v532 = vpop.permute.xlu0 %531
    %v534 = vmul.f32 %v527, %v519
    %v535 = vmul.f32 %v532, %v521
    %v536 = vadd.f32 %v534, %v535
    %v537 = vrot.slane %v536, 4
    %v538 = vadd.f32 %v536, %v537
    %v539 = vrot.slane %v538, 2
    %v540 = vadd.f32 %v538, %v539
    %v541 = vrot.slane %v540, 1
    %v542 = vadd.f32 %v540, %v541
    %v543 = vld [vmem:[#allocation2] sm:$0x1]
    %545 = vset.pattern.permute.xlu0 0
    %546 = vperm.xlu0 %545, %v543
    %v547 = vpop.permute.xlu0 %546
    %v549 = vlaneseq
    %v550 = vshrl.u32 %v549, 7
    %v551 = vsub.s32 0, %v550
    %v552 = vrot.slane %v547, %v551
    %v553 = vadd.f32 %v542, %v552
    %554 = vst [vmem:[#allocation3] sm:$0x1] %v553
    // Predicated region
    $region38: #{tpu_custom_call.1} parent=1 // pred_check
      _
    $region39: #{tpu_custom_call.1} parent=1 // pred_check_branch
      %556 = sbr.rel (0) target = $region41
    $region40: #{tpu_custom_call.1} parent=1 // pred_region
      %s558 = ssub.s32 16, 16
      %559 = vsyncadd [#allocation4], %s558
      %s561 = sshll.u32 [#allocation3], 4
      %s562 = int_to_ptr.vmem [resolvable:$true] %s561
      %564 = dma.vmem_to_hbm [thread:$0]  %s562, 16, %s9, [#allocation4]
    $region41: #{tpu_custom_call.1} parent=1 // pred_fallthru
      _
    // Predicated region
    $region42: #{tpu_custom_call.1} parent=1 // pred_check
      _
    $region43: #{tpu_custom_call.1} parent=1 // pred_check_branch
      %566 = sbr.rel (0) target = $region45
    $region44: #{tpu_custom_call.1} parent=1 // pred_region
      %567 = dma.done [#allocation4], 16
    $region45: #{tpu_custom_call.1} parent=1 // pred_fallthru
      _
    %568 = vsyncpa [#allocation4], 1

</llo_original>
